<compile_context>
chip_gen: v5e
topology: v5e:2x2
jax: 0.10.0
libtpu: 0.0.40
codegen_flags: <defaults>
</compile_context>

<pallas_src>
import jax
import jax.numpy as jnp
from jax import lax
from jax.experimental import pallas as pl
from jax.experimental.pallas import tpu as pltpu


def _round_up(a, b):
    return ((a + b - 1) // b) * b


def _make_kernel(D, C):
    """Build the kernel body with static hidden dim D and class count C."""

    def kernel(x_ref, wab_ref, bab_ref, wct_ref, bc_ref, out_ref):
        x = x_ref[...]                                             # (TM, L)
        # Fused gate projection: one MXU matmul covers both Linear(L, D)s.
        z = jnp.dot(x, wab_ref[...],
                    preferred_element_type=jnp.float32)            # (TM, 2D)
        z = z + bab_ref[...]
        a = jnp.tanh(z[:, :D])                                     # (TM, D)
        b = jax.nn.sigmoid(z[:, D:])                               # (TM, D)
        gated = a * b                                              # (TM, D) f32

        wct = wct_ref[...].astype(jnp.float32)                     # (C, D)
        if C == 1:
            # (TM, D) x (D, 1) wastes >= 127/128 of the MXU N dim; use the VPU
            # multiply + XLU lane reduce (slots with slack) instead.
            A = jnp.sum(gated * wct, axis=-1, keepdims=True)       # (TM, 1)
        else:
            # Contract D of gated with D of Wc^T -> (TM, C) on the MXU.
            A = lax.dot_general(gated, wct, (((1,), (1,)), ((), ())),
                                preferred_element_type=jnp.float32)
        A = A + bc_ref[...]                                        # (TM, C)
        out_ref[...] = A.astype(out_ref.dtype)

    return kernel


def _pick_tile_m(N, L, D, C, x_itemsize, w_itemsize, budget_bytes):
    """Largest multiple-of-8 row tile whose working set fits the VMEM budget."""
    # Resident weights/biases (assume double-buffered by the pipeline).
    fixed = 2 * ((L * 2 * D + C * D) * w_itemsize + (2 * D + C) * 4)
    # Per-row: double-buffered x tile + output tile, plus f32 intermediates
    # (z is 2D wide, gated/a/b ~2D wide).
    per_row = 2 * (L * x_itemsize + C * 4) + 4 * D * 4
    avail = max(budget_bytes - fixed, 8 * per_row)
    tm = int(min(1024, avail // per_row))
    tm = max(8, (tm // 8) * 8)
    tm = min(tm, _round_up(N, 8))
    # v7x has 2 TensorCores; keep >= 2 grid steps when there is enough work so
    # the "parallel" axis can shard across them (no-op on v5e/v6e).
    if N >= 16 and pl.cdiv(N, tm) < 2:
        tm = max(8, _round_up(pl.cdiv(N, 2), 8))
    return tm


def attn_net_gated(x, wa, ba, wb, bb, wc, bc, *, tile_m=None,
                   vmem_budget_bytes=14 * 1024 * 1024):
    """Forward pass of Attn_Net_Gated (dropout=False).  Returns (A, x)."""
    N, L = x.shape
    D = wa.shape[1]
    C = wc.shape[1]

    # Fuse the two gate projections: Wa||Wb -> [L, 2D], ba||bb -> [1, 2D].
    wab = jnp.concatenate([wa, wb], axis=1).astype(x.dtype)          # (L, 2D)
    bab = jnp.concatenate([ba, bb], axis=0).reshape(1, 2 * D)
    bab = bab.astype(jnp.float32)                                    # (1, 2D)
    wct = wc.T                                                       # (C, D)
    bc2 = bc.reshape(1, C).astype(jnp.float32)                       # (1, C)

    if tile_m is None:
        tile_m = _pick_tile_m(N, L, D, C,
                              jnp.dtype(x.dtype).itemsize,
                              jnp.dtype(wab.dtype).itemsize,
                              vmem_budget_bytes)
    grid = (pl.cdiv(N, tile_m),)  # ragged last tile handled by masked writes

    A = pl.pallas_call(
        _make_kernel(D, C),
        out_shape=jax.ShapeDtypeStruct((N, C), x.dtype),
        grid_spec=pltpu.PrefetchScalarGridSpec(
            num_scalar_prefetch=0,
            grid=grid,
            in_specs=[
                # x rows are the only per-step stream; weights stay resident.
                # TODO(synk): if DMA of x is still exposed at very large N, add
                # pipeline_mode=pl.Buffered(3) on this spec.
                pl.BlockSpec((tile_m, L), lambda i: (i, 0)),   # x
                pl.BlockSpec((L, 2 * D), lambda i: (0, 0)),    # Wa || Wb
                pl.BlockSpec((1, 2 * D), lambda i: (0, 0)),    # ba || bb
                pl.BlockSpec((C, D), lambda i: (0, 0)),        # Wc^T
                pl.BlockSpec((1, C), lambda i: (0, 0)),        # bc
            ],
            out_specs=pl.BlockSpec((tile_m, C), lambda i: (i, 0)),
        ),
        compiler_params=pltpu.CompilerParams(
            dimension_semantics=("parallel",)),
    )(x, wab, bab, wct, bc2)
    return A, x


def _init_params(key, L, D, C, dtype=jnp.float32):
    """Deterministic synthetic parameters matching nn.Linear shapes
    (stored pre-transposed: [in, out])."""
    ks = jax.random.split(key, 6)
    scale_L = 1.0 / jnp.sqrt(L)
    scale_D = 1.0 / jnp.sqrt(D)
    wa = jax.random.uniform(ks[0], (L, D), dtype, -scale_L, scale_L)
    ba = jax.random.uniform(ks[1], (D,), dtype, -scale_L, scale_L)
    wb = jax.random.uniform(ks[2], (L, D), dtype, -scale_L, scale_L)
    bb = jax.random.uniform(ks[3], (D,), dtype, -scale_L, scale_L)
    wc = jax.random.uniform(ks[4], (D, C), dtype, -scale_D, scale_D)
    bc = jax.random.uniform(ks[5], (C,), dtype, -scale_D, scale_D)
    return wa, ba, wb, bb, wc, bc


def _reference(x, wa, ba, wb, bb, wc, bc):
    a = jnp.tanh(x @ wa + ba)
    b = jax.nn.sigmoid(x @ wb + bb)
    return (a * b) @ wc + bc


if __name__ == "__main__":
    # Small shapes consistent with the module (L=input dim, D=hidden,
    # C=n_classes).  N deliberately NOT a multiple of the tile so the ragged
    # last tile path is exercised.
    N, L, D = 20, 128, 64
    key = jax.random.PRNGKey(0)
    kx, kp = jax.random.split(key)
    x = jax.random.normal(kx, (N, L), jnp.float32)

    ok = True
    for C in (1, 3):   # exercise both the VPU-reduce (C=1) and MXU (C>1) tails
        params = _init_params(kp, L, D, C)
        A, x_out = attn_net_gated(x, *params)       # dropout=False path
        A = jax.block_until_ready(A)
        x_out = jax.block_until_ready(x_out)

        A_ref = _reference(x, *params)
        ok &= A.shape == (N, C)
        ok &= x_out.shape == (N, L)
        ok &= bool(jnp.allclose(A, A_ref, atol=1e-4, rtol=1e-4))
        ok &= bool(jnp.array_equal(x_out, x))

    assert ok
    print("KERNEL_OK")
</pallas_src>

<mosaic_0001>
module attributes {stable_mosaic.version = 11 : i64} {
  func.func @kernel(%arg0: i32, %arg1: memref<16x128xf32, #tpu.memory_space<vmem>>, %arg2: memref<128x128xf32, #tpu.memory_space<vmem>>, %arg3: memref<1x128xf32, #tpu.memory_space<vmem>>, %arg4: memref<1x64xf32, #tpu.memory_space<vmem>>, %arg5: memref<1x1xf32, #tpu.memory_space<vmem>>, %arg6: memref<16x1xf32, #tpu.memory_space<vmem>>) attributes {dimension_semantics = [#tpu.dimension_semantics<parallel>], iteration_bounds = array<i64: 2>, scalar_prefetch = 0 : i64, scratch_operands = 0 : i64, tpu.core_type = #tpu.core_type<tc>, window_params = [{transform_indices = @transform_0, window_bounds = array<i64: 16, 128>}, {pipeline_mode = #tpu.pipeline_mode<synchronous>, transform_indices = @transform_1, window_bounds = array<i64: 128, 128>}, {pipeline_mode = #tpu.pipeline_mode<synchronous>, transform_indices = @transform_2, window_bounds = array<i64: 1, 128>}, {pipeline_mode = #tpu.pipeline_mode<synchronous>, transform_indices = @transform_3, window_bounds = array<i64: 1, 64>}, {pipeline_mode = #tpu.pipeline_mode<synchronous>, transform_indices = @transform_4, window_bounds = array<i64: 1, 1>}, {transform_indices = @transform_5, window_bounds = array<i64: 16, 1>}]} {
    %c0 = arith.constant 0 : index
    %c0_0 = arith.constant 0 : index
    %0 = vector.load %arg1[%c0, %c0_0] : memref<16x128xf32, #tpu.memory_space<vmem>>, vector<16x128xf32>
    %c0_1 = arith.constant 0 : index
    %c0_2 = arith.constant 0 : index
    %1 = vector.load %arg2[%c0_1, %c0_2] : memref<128x128xf32, #tpu.memory_space<vmem>>, vector<128x128xf32>
    %cst = arith.constant dense<0.000000e+00> : vector<16x128xf32>
    %2 = tpu.matmul %0, %1, %cst {dimension_numbers = #tpu.dot_dimension_numbers<[1], [0], [0], [1], [0, 0, 1, 1], [], []>} : vector<16x128xf32>, vector<128x128xf32>, vector<16x128xf32> -> vector<16x128xf32>
    %c0_3 = arith.constant 0 : index
    %c0_4 = arith.constant 0 : index
    %3 = vector.load %arg3[%c0_3, %c0_4] : memref<1x128xf32, #tpu.memory_space<vmem>>, vector<1x128xf32>
    %4 = vector.broadcast %3 : vector<1x128xf32> to vector<16x128xf32>
    %5 = arith.addf %2, %4 : vector<16x128xf32>
    %6 = vector.extract_strided_slice %5 {offsets = [0, 0], sizes = [16, 64], strides = [1, 1]} : vector<16x128xf32> to vector<16x64xf32>
    %7 = math.tanh %6 : vector<16x64xf32>
    %8 = vector.extract_strided_slice %5 {offsets = [0, 64], sizes = [16, 64], strides = [1, 1]} : vector<16x128xf32> to vector<16x64xf32>
    %9 = arith.negf %8 : vector<16x64xf32>
    %10 = math.exp %9 : vector<16x64xf32>
    %cst_5 = arith.constant 1.000000e+00 : f32
    %11 = vector.broadcast %cst_5 : f32 to vector<16x64xf32>
    %12 = arith.addf %11, %10 : vector<16x64xf32>
    %13 = arith.divf %11, %12 : vector<16x64xf32>
    %14 = arith.mulf %7, %13 : vector<16x64xf32>
    %c0_6 = arith.constant 0 : index
    %c0_7 = arith.constant 0 : index
    %15 = vector.load %arg4[%c0_6, %c0_7] : memref<1x64xf32, #tpu.memory_space<vmem>>, vector<1x64xf32>
    %16 = vector.broadcast %15 : vector<1x64xf32> to vector<16x64xf32>
    %17 = arith.mulf %14, %16 : vector<16x64xf32>
    %cst_8 = arith.constant dense<0.000000e+00> : vector<16xf32>
    %18 = vector.multi_reduction <add>, %17, %cst_8 [1] : vector<16x64xf32> to vector<16xf32>
    %19 = vector.shape_cast %18 : vector<16xf32> to vector<16x1xf32>
    %c0_9 = arith.constant 0 : index
    %c0_10 = arith.constant 0 : index
    %20 = vector.load %arg5[%c0_9, %c0_10] : memref<1x1xf32, #tpu.memory_space<vmem>>, vector<1x1xf32>
    %21 = vector.broadcast %20 : vector<1x1xf32> to vector<16x1xf32>
    %22 = arith.addf %19, %21 : vector<16x1xf32>
    %c0_11 = arith.constant 0 : index
    %c0_12 = arith.constant 0 : index
    %23 = vector.load %arg6[%c0_11, %c0_12] : memref<16x1xf32, #tpu.memory_space<vmem>>, vector<16x1xf32>
    tpu.vector_store %arg6[%c0_11, %c0_12], %22 {strides = array<i32>} : memref<16x1xf32, #tpu.memory_space<vmem>>, vector<16x1xf32>,
    return
  }
  func.func @transform_0(%arg0: i32) -> (i32, i32) {
    %c0_i32 = arith.constant 0 : i32
    %c0_i32_0 = arith.constant 0 : i32
    return %arg0, %c0_i32 : i32, i32
  }
  func.func @transform_1(%arg0: i32) -> (i32, i32) {
    %c0_i32 = arith.constant 0 : i32
    %c0_i32_0 = arith.constant 0 : i32
    %c0_i32_1 = arith.constant 0 : i32
    return %c0_i32, %c0_i32_0 : i32, i32
  }
  func.func @transform_2(%arg0: i32) -> (i32, i32) {
    %c0_i32 = arith.constant 0 : i32
    %c0_i32_0 = arith.constant 0 : i32
    %c0_i32_1 = arith.constant 0 : i32
    return %c0_i32, %c0_i32_0 : i32, i32
  }
  func.func @transform_3(%arg0: i32) -> (i32, i32) {
    %c0_i32 = arith.constant 0 : i32
    %c0_i32_0 = arith.constant 0 : i32
    %c0_i32_1 = arith.constant 0 : i32
    return %c0_i32, %c0_i32_0 : i32, i32
  }
  func.func @transform_4(%arg0: i32) -> (i32, i32) {
    %c0_i32 = arith.constant 0 : i32
    %c0_i32_0 = arith.constant 0 : i32
    %c0_i32_1 = arith.constant 0 : i32
    return %c0_i32, %c0_i32_0 : i32, i32
  }
  func.func @transform_5(%arg0: i32) -> (i32, i32) {
    %c0_i32 = arith.constant 0 : i32
    %c0_i32_0 = arith.constant 0 : i32
    return %arg0, %c0_i32 : i32, i32
  }
}

</mosaic_0001>

<llo_original>
// kernel: tpu_custom_call.1
$region0: #{tpu_custom_call.1}
  #allocation0 [shape = 'u32[]', space=smem, size = 0x4, offset = 0x4, fixed_abs, tag = 'smem constant byte address 0x4 - core index']
  #allocation1 [shape = 'u32[72,128]{1,0:T(1,128)}', space=vmem, size = 0x9000, scoped, tag = 'internal scratch']
  #allocation2 [shape = 'f32[1,1]{1,0:T(1,128)S(1)}', space=vmem, size = 0x200, scoped, tag = 'scoped memory for tpu_custom_call.1']
  %s0 = inlined_call_operand.hbm [shape: f32[20,128], index: 0, kind: input, shape index: {}]
  %s1 = inlined_call_operand.hbm [shape: f32[128,128], index: 1, kind: input, shape index: {}]
  %s2 = inlined_call_operand.vmem [shape: f32[1,128], index: 2, kind: input, shape index: {}]
  %s3 = inlined_call_operand.vmem [shape: f32[1,64], index: 3, kind: input, shape index: {}]
  %s4 = inlined_call_operand.<no memory space> [shape: f32[1,1], index: 4, kind: input, shape index: {}]
  %s5 = inlined_call_operand.vmem [shape: f32[20,1], index: 5, kind: output, shape index: {}]
  %s6 = sld [smem:[#allocation0]]
  $region109: #{tpu_custom_call.1} parent=0
    _
  %s8 = ssub.s32 1, %s6
  %s9 = scalar_select 0, %s8, %s6
  %v10 = vstv %s4
  %11 = vst [vmem:[#allocation2] sm:$0x1] %v10
  $region1: #{tpu_custom_call.1} parent=0
    #allocation3 [shape = 'u8[16384]{0}', space=vmem, size = 0x4000, scoped, tag = 'input window, operand 0']
    #allocation4 [shape = 's32[2]{0}', space=sflag, size = 0x8, scoped, tag = 'scoped memory for tpu_custom_call.1']
    #allocation5 [shape = 'u8[65536]{0}', space=vmem, size = 0x10000, scoped, tag = 'input window, operand 1, single buffered']
    #allocation6 [shape = 's32[1]{0}', space=sflag, size = 0x4, scoped, tag = 'scoped memory for tpu_custom_call.1']
    #allocation7 [shape = 'u8[16384]{0}', space=vmem, size = 0x4000, scoped, tag = 'output window, operand 0']
    %12 = vsyncpa [#allocation4], 0
    %s13 = scalar_lea.sflag [#allocation4], 1
    %14 = vsyncpa %s13, 0
    %15 = vsyncpa [#allocation6], 0
    loop: start=0, step=1, limit=4
    $region2: #{tpu_custom_call.1} parent=1 // loop_pre_header
      _
    $region3: #{tpu_custom_call.1} parent=1 // loop_header
      %s17 = sphi 0, %s21
      %p18 = scmp.ge.s32.totalorder %s17, 4
      %s27 = sphi 0, %s29
      %s30 = sphi 0, %s27
      %s31 = sphi 0, %s30
      %s47 = sphi 0, %s31
      %s51 = sphi 0, %s51
      %s53 = sphi 0, %s51
      %s54 = sphi 0, %s53
      %s68 = sphi 0, %s54
      %s72 = sphi 0, %s72
      %s74 = sphi 0, %s72
      %s75 = sphi 0, %s74
      %s89 = sphi 0, %s75
      %s93 = sphi 0, %s93
      %s95 = sphi 0, %s93
      %s96 = sphi 0, %s95
      %s110 = sphi 0, %s96
      %s114 = sphi 0, %s114
      %s116 = sphi 0, %s114
      %s117 = sphi 0, %s116
      %s131 = sphi 0, %s117
      %s137 = sphi 0, %s139
      %s140 = sphi 0, %s137
      %s141 = sphi 0, %s140
      %s157 = sphi 0, %s141
    $region4: #{tpu_custom_call.1} parent=1 // loop_header_branch
      %20 = sbr.rel (%p18) target = $region8
    $region5: #{tpu_custom_call.1} parent=1 // loop_body
      %s22 = ssub.s32 %s17, 1
      %s23 = ssub.s32 %s17, 2
      %s24 = sadd.s32 %s17, 1
      %s25 = ssub.s32 %s17, %s24
      %p26 = scmp.eq.s32.totalorder %s25, 0
      %s28 = sadd.s32 %s27, 1
      %s29 = scalar_select %p26, %s27, %s28
      %p32 = pneg %p26
      %p33 = scmp.eq.s32.totalorder %s17, 1
      %p34 = por %p32, %p33
      %p35 = scmp.ne.s32.totalorder %s27, %s30
      %p36 = scmp.eq.s32.totalorder %s17, 0
      %p37 = por %p35, %p36
      %p38 = scmp.ne.s32.totalorder %s27, %s30
      %p39 = scmp.eq.s32.totalorder %s22, 1
      %p40 = por %p38, %p39
      %p41 = scmp.ne.s32.totalorder %s30, %s31
      %p42 = scmp.eq.s32.totalorder %s22, 0
      %p43 = por %p41, %p42
      %p44 = scmp.ne.s32.totalorder %s30, %s31
      %p45 = scmp.eq.s32.totalorder %s23, 1
      %p46 = por %p44, %p45
      %p48 = scmp.ne.s32.totalorder %s31, %s47
      %p49 = scmp.eq.s32.totalorder %s23, 0
      %p50 = por %p48, %p49
      %s52 = sadd.s32 %s51, 1
      %p55 = scmp.eq.s32.totalorder %s17, 1
      %p56 = scmp.ne.s32.totalorder %s51, %s53
      %p57 = scmp.eq.s32.totalorder %s17, 0
      %p58 = por %p56, %p57
      %p59 = scmp.ne.s32.totalorder %s51, %s53
      %p60 = scmp.eq.s32.totalorder %s22, 1
      %p61 = por %p59, %p60
      %p62 = scmp.ne.s32.totalorder %s53, %s54
      %p63 = scmp.eq.s32.totalorder %s22, 0
      %p64 = por %p62, %p63
      %p65 = scmp.ne.s32.totalorder %s53, %s54
      %p66 = scmp.eq.s32.totalorder %s23, 1
      %p67 = por %p65, %p66
      %p69 = scmp.ne.s32.totalorder %s54, %s68
      %p70 = scmp.eq.s32.totalorder %s23, 0
      %p71 = por %p69, %p70
      %s73 = sadd.s32 %s72, 1
      %p76 = scmp.eq.s32.totalorder %s17, 1
      %p77 = scmp.ne.s32.totalorder %s72, %s74
      %p78 = scmp.eq.s32.totalorder %s17, 0
      %p79 = por %p77, %p78
      %p80 = scmp.ne.s32.totalorder %s72, %s74
      %p81 = scmp.eq.s32.totalorder %s22, 1
      %p82 = por %p80, %p81
      %p83 = scmp.ne.s32.totalorder %s74, %s75
      %p84 = scmp.eq.s32.totalorder %s22, 0
      %p85 = por %p83, %p84
      %p86 = scmp.ne.s32.totalorder %s74, %s75
      %p87 = scmp.eq.s32.totalorder %s23, 1
      %p88 = por %p86, %p87
      %p90 = scmp.ne.s32.totalorder %s75, %s89
      %p91 = scmp.eq.s32.totalorder %s23, 0
      %p92 = por %p90, %p91
      %s94 = sadd.s32 %s93, 1
      %p97 = scmp.eq.s32.totalorder %s17, 1
      %p98 = scmp.ne.s32.totalorder %s93, %s95
      %p99 = scmp.eq.s32.totalorder %s17, 0
      %p100 = por %p98, %p99
      %p101 = scmp.ne.s32.totalorder %s93, %s95
      %p102 = scmp.eq.s32.totalorder %s22, 1
      %p103 = por %p101, %p102
      %p104 = scmp.ne.s32.totalorder %s95, %s96
      %p105 = scmp.eq.s32.totalorder %s22, 0
      %p106 = por %p104, %p105
      %p107 = scmp.ne.s32.totalorder %s95, %s96
      %p108 = scmp.eq.s32.totalorder %s23, 1
      %p109 = por %p107, %p108
      %p111 = scmp.ne.s32.totalorder %s96, %s110
      %p112 = scmp.eq.s32.totalorder %s23, 0
      %p113 = por %p111, %p112
      %s115 = sadd.s32 %s114, 1
      %p118 = scmp.eq.s32.totalorder %s17, 1
      %p119 = scmp.ne.s32.totalorder %s114, %s116
      %p120 = scmp.eq.s32.totalorder %s17, 0
      %p121 = por %p119, %p120
      %p122 = scmp.ne.s32.totalorder %s114, %s116
      %p123 = scmp.eq.s32.totalorder %s22, 1
      %p124 = por %p122, %p123
      %p125 = scmp.ne.s32.totalorder %s116, %s117
      %p126 = scmp.eq.s32.totalorder %s22, 0
      %p127 = por %p125, %p126
      %p128 = scmp.ne.s32.totalorder %s116, %s117
      %p129 = scmp.eq.s32.totalorder %s23, 1
      %p130 = por %p128, %p129
      %p132 = scmp.ne.s32.totalorder %s117, %s131
      %p133 = scmp.eq.s32.totalorder %s23, 0
      %p134 = por %p132, %p133
      %s135 = ssub.s32 %s17, %s24
      %p136 = scmp.eq.s32.totalorder %s135, 0
      %s138 = sadd.s32 %s137, 1
      %s139 = scalar_select %p136, %s137, %s138
      %p142 = pneg %p136
      %p143 = scmp.eq.s32.totalorder %s17, 1
      %p144 = por %p142, %p143
      %p145 = scmp.ne.s32.totalorder %s137, %s140
      %p146 = scmp.eq.s32.totalorder %s17, 0
      %p147 = por %p145, %p146
      %p148 = scmp.ne.s32.totalorder %s137, %s140
      %p149 = scmp.eq.s32.totalorder %s22, 1
      %p150 = por %p148, %p149
      %p151 = scmp.ne.s32.totalorder %s140, %s141
      %p152 = scmp.eq.s32.totalorder %s22, 0
      %p153 = por %p151, %p152
      %p154 = scmp.ne.s32.totalorder %s140, %s141
      %p155 = scmp.eq.s32.totalorder %s23, 1
      %p156 = por %p154, %p155
      %p158 = scmp.ne.s32.totalorder %s141, %s157
      %p159 = scmp.eq.s32.totalorder %s23, 0
      %p160 = por %p158, %p159
      %p161 = scmp.le.s32.totalorder 1, %s17
      %p162 = scmp.lt.s32.totalorder %s17, 3
      %p163 = pnand %p161, %p162
      %p164 = pneg %p163
      // Predicated region
      $region9: #{tpu_custom_call.1} parent=5 // pred_check
        _
      $region10: #{tpu_custom_call.1} parent=5 // pred_check_branch
        %166 = sbr.rel (%p163) target = $region12
      $region11: #{tpu_custom_call.1} parent=5 // pred_region
        %s167 = ssub.s32 %s17, 1
        // Predicated region
        $region13: #{tpu_custom_call.1} parent=11 // pred_check
          %p168 = pneg %p64
        $region14: #{tpu_custom_call.1} parent=11 // pred_check_branch
          %170 = sbr.rel (%p168) target = $region16
        $region15: #{tpu_custom_call.1} parent=11 // pred_region
          %172 = vsyncadd [#allocation6], 0
          %s173 = sshll.u32 %s1, 4
          %s174 = int_to_ptr.hbm [resolvable:$true] %s173
          %s175 = sshll.u32 [#allocation5], 4
          %s176 = int_to_ptr.vmem [resolvable:$true] %s175
          %181 = dma.hbm_to_vmem [thread:$0]  %s174, 2048, %s176, [#allocation6], 128, 128, 8
        $region16: #{tpu_custom_call.1} parent=11 // pred_fallthru
          _
        // Predicated region
        $region17: #{tpu_custom_call.1} parent=11 // pred_check
          %p182 = pneg %p85
        $region18: #{tpu_custom_call.1} parent=11 // pred_check_branch
          %184 = sbr.rel (%p182) target = $region20
        $region19: #{tpu_custom_call.1} parent=11 // pred_region
          _
        $region20: #{tpu_custom_call.1} parent=11 // pred_fallthru
          _
        // Predicated region
        $region21: #{tpu_custom_call.1} parent=11 // pred_check
          %p185 = pneg %p106
        $region22: #{tpu_custom_call.1} parent=11 // pred_check_branch
          %187 = sbr.rel (%p185) target = $region24
        $region23: #{tpu_custom_call.1} parent=11 // pred_region
          _
        $region24: #{tpu_custom_call.1} parent=11 // pred_fallthru
          _
        // Predicated region
        $region25: #{tpu_custom_call.1} parent=11 // pred_check
          %p188 = pneg %p127
        $region26: #{tpu_custom_call.1} parent=11 // pred_check_branch
          %190 = sbr.rel (%p188) target = $region28
        $region27: #{tpu_custom_call.1} parent=11 // pred_region
          _
        $region28: #{tpu_custom_call.1} parent=11 // pred_fallthru
          _
      $region12: #{tpu_custom_call.1} parent=5 // pred_fallthru
        _
      %p191 = scmp.lt.s32.totalorder %s17, 2
      // Predicated region
      $region29: #{tpu_custom_call.1} parent=5 // pred_check
        %p192 = pneg %p191
      $region30: #{tpu_custom_call.1} parent=5 // pred_check_branch
        %194 = sbr.rel (%p192) target = $region32
      $region31: #{tpu_custom_call.1} parent=5 // pred_region
        // Predicated region
        $region33: #{tpu_custom_call.1} parent=31 // pred_check
          %p195 = pneg %p37
        $region34: #{tpu_custom_call.1} parent=31 // pred_check_branch
          %197 = sbr.rel (%p195) target = $region36
        $region35: #{tpu_custom_call.1} parent=31 // pred_region
          %s198 = sand.u32 %s27, 1
          %s199 = scalar_lea.sflag [#allocation4], %s198
          %s200 = sand.u32 %s27, 1
          %s201 = smul.addr %s200, 16
          %s202 = scalar_lea.vmem [#allocation3], %s201
          %s203 = smul.u32 2, %s17
          %s204 = ssub.s32 3, %s203
          %p205 = scmp.lt.s32.totalorder %s204, 2
          %s206 = scalar_select %p205, %s204, 2
          %s207 = smul.u32 8, %s206
          %s208 = ssub.s32 16, %s207
          %s209 = sshll.u32 %s208, 4
          %210 = vsyncadd %s199, %s209
          %p211 = scmp.ne.s32.totalorder 0, %s207
          %s212 = smul.addr %s203, 8
          %s213 = scalar_lea.hbm %s0, %s212
          %s214 = smul.u32 8, %s206
          %s215 = sshll.u32 %s213, 4
          %s216 = int_to_ptr.hbm [resolvable:$true] %s215
          %s217 = sshll.u32 %s202, 4
          %s218 = int_to_ptr.vmem [resolvable:$true] %s217
          %s219 = sshll.u32 %s214, 4
          %223 = dma.hbm_to_vmem [thread:$0]  (%p211), %s216, %s219, %s218, %s199, 128, 128, 8
        $region36: #{tpu_custom_call.1} parent=31 // pred_fallthru
          _
      $region32: #{tpu_custom_call.1} parent=5 // pred_fallthru
        _
      %p224 = scmp.le.s32.totalorder 1, %s17
      %p225 = scmp.lt.s32.totalorder %s17, 3
      %p226 = pnand %p224, %p225
      %p227 = pneg %p226
      // Predicated region
      $region37: #{tpu_custom_call.1} parent=5 // pred_check
        _
      $region38: #{tpu_custom_call.1} parent=5 // pred_check_branch
        %229 = sbr.rel (%p226) target = $region40
      $region39: #{tpu_custom_call.1} parent=5 // pred_region
        %s230 = ssub.s32 %s17, 1
        %s231 = sand.u32 %s30, 1
        %s232 = scalar_lea.sflag [#allocation4], %s231
        %s233 = sand.u32 %s30, 1
        %s234 = smul.addr %s233, 16
        %s235 = scalar_lea.vmem [#allocation3], %s234
        // Predicated region
        $region41: #{tpu_custom_call.1} parent=39 // pred_check
          %p236 = pneg %p43
        $region42: #{tpu_custom_call.1} parent=39 // pred_check_branch
          %238 = sbr.rel (%p236) target = $region44
        $region43: #{tpu_custom_call.1} parent=39 // pred_region
          %240 = dma.done %s232, 256
        $region44: #{tpu_custom_call.1} parent=39 // pred_fallthru
          _
        // Predicated region
        $region45: #{tpu_custom_call.1} parent=39 // pred_check
          %p241 = pneg %p64
        $region46: #{tpu_custom_call.1} parent=39 // pred_check_branch
          %243 = sbr.rel (%p241) target = $region48
        $region47: #{tpu_custom_call.1} parent=39 // pred_region
          %245 = dma.done [#allocation6], 2048
        $region48: #{tpu_custom_call.1} parent=39 // pred_fallthru
          _
        %s246 = sand.u32 %s30, 1
        %s247 = scalar_lea.sflag [#allocation4], %s246
        %s248 = sand.u32 %s30, 1
        %s249 = smul.addr %s248, 16
        %s250 = scalar_lea.vmem [#allocation3], %s249
        %p251 = pneg %p43
        %p252 = pneg %p40
        %p253 = pneg %p64
        %p254 = pneg %p61
        %p255 = pneg %p85
        %p256 = pneg %p82
        %p257 = pneg %p106
        %p258 = pneg %p103
        %p259 = pneg %p127
        %p260 = pneg %p124
        %p261 = pneg %p153
        %p262 = pneg %p150
        %s263 = sand.u32 %s140, 1
        %s264 = sand.u32 %s140, 1
        %s265 = smul.addr %s264, 16
        %s266 = scalar_lea.vmem [#allocation7], %s265
        %s267 = smul.u32 2, %s22
        %s268 = ssub.s32 3, %s267
        %p269 = scmp.lt.s32.totalorder %s268, 2
        %s270 = scalar_select %p269, %s268, 2
        %s271 = smul.u32 8, %s270
        %s272 = smul.u32 2, %s22
        %s273 = ssub.s32 3, %s272
        %p274 = scmp.lt.s32.totalorder %s273, 2
        %s275 = scalar_select %p274, %s273, 2
        %s276 = smul.u32 8, %s275
        %v277 = vld [vmem:[%s235] sm:$0xff]
        %v278 = vld [vmem:[%s235 + $0x8] sm:$0xff]
        %v279 = vld [vmem:[#allocation5] sm:$0xff]
        %v280 = vld [vmem:[#allocation5 + $0x8] sm:$0xff]
        %v281 = vld [vmem:[#allocation5 + $0x10] sm:$0xff]
        %v282 = vld [vmem:[#allocation5 + $0x18] sm:$0xff]
        %v283 = vld [vmem:[#allocation5 + $0x20] sm:$0xff]
        %v284 = vld [vmem:[#allocation5 + $0x28] sm:$0xff]
        %v285 = vld [vmem:[#allocation5 + $0x30] sm:$0xff]
        %v286 = vld [vmem:[#allocation5 + $0x38] sm:$0xff]
        %v287 = vld [vmem:[#allocation5 + $0x40] sm:$0xff]
        %v288 = vld [vmem:[#allocation5 + $0x48] sm:$0xff]
        %v289 = vld [vmem:[#allocation5 + $0x50] sm:$0xff]
        %v290 = vld [vmem:[#allocation5 + $0x58] sm:$0xff]
        %v291 = vld [vmem:[#allocation5 + $0x60] sm:$0xff]
        %v292 = vld [vmem:[#allocation5 + $0x68] sm:$0xff]
        %v293 = vld [vmem:[#allocation5 + $0x70] sm:$0xff]
        %v294 = vld [vmem:[#allocation5 + $0x78] sm:$0xff]
        %v295 = vld [vmem:[%s2] sm:$0x1]
        %v297 = vperm.slane %v295, 0
        %299 = vmatpush.msra.mxu0 %v294
        %300 = vmatpush.msra.mxu0 %v293
        %301 = vmatpush.msra.mxu0 %v292
        %302 = vmatpush.msra.mxu0 %v291
        %303 = vmatpush.msra.mxu0 %v290
        %304 = vmatpush.msra.mxu0 %v289
        %305 = vmatpush.msra.mxu0 %v288
        %306 = vmatpush.msra.mxu0 %v287
        %307 = vmatpush.msra.mxu0 %v286
        %308 = vmatpush.msra.mxu0 %v285
        %309 = vmatpush.msra.mxu0 %v284
        %310 = vmatpush.msra.mxu0 %v283
        %311 = vmatpush.msra.mxu0 %v282
        %312 = vmatpush.msra.mxu0 %v281
        %313 = vmatpush.msra.mxu0 %v280
        %314 = vmatpush.msra.mxu0 %v279
        %315 = vmatmul.f32.gmra.mxu0 %v277
        %v316 = vpop.f32.mrf.mxu0
        %v317 = vadd.f32 %v297, %v316
        %318 = vmatmul.f32.gmra.mxu0 %v278
        %v319 = vpop.f32.mrf.mxu0
        %v320 = vadd.f32 %v297, %v319
        %321 = vdwg.mxu0
        %v322 = vtanh.pop %v317
        %v323 = vtanh.pop %v320
        %v324 = vxor.u32 %v317, 2147483648
        %v325 = vxor.u32 %v320, 2147483648
        %v326 = vmul.f32 %v324, 1.442695
        %v327 = vpow.pop %v326
        %v328 = vmul.f32 %v325, 1.442695
        %v329 = vpow.pop %v328
        %v330 = vadd.f32 %v327, 1.0
        %v331 = vadd.f32 %v329, 1.0
        %v332 = vrcp.pop %v330
        %v333 = vmul.f32 %v330, %v332
        %v334 = vsub.f32 1.0, %v333
        %v335 = vmul.f32 %v332, %v334
        %v336 = vadd.f32 %v332, %v335
        %vm337 = vweird.f32 %v330
        %vm338 = vweird.f32 %v332
        %vm339 = vmor %vm337, %vm338
        %v340 = vsel %vm339, %v332, %v336
        %v341 = vand.u32 2147483647, %v330
        %vm342 = vcmp.eq.f32.partialorder %v341, 8.507059e+37
        %v343 = vand.u32 %v330, 2147483648
        %v344 = vor.u32 1.1754944e-38, %v343
        %v345 = vsel %vm342, %v344, %v340
        %v346 = vmul.f32 1.0, %v345
        %v347 = vrcp.pop %v331
        %v348 = vmul.f32 %v331, %v347
        %v349 = vsub.f32 1.0, %v348
        %v350 = vmul.f32 %v347, %v349
        %v351 = vadd.f32 %v347, %v350
        %vm352 = vweird.f32 %v331
        %vm353 = vweird.f32 %v347
        %vm354 = vmor %vm352, %vm353
        %v355 = vsel %vm354, %v347, %v351
        %v356 = vand.u32 2147483647, %v331
        %vm357 = vcmp.eq.f32.partialorder %v356, 8.507059e+37
        %v358 = vand.u32 %v331, 2147483648
        %v359 = vor.u32 1.1754944e-38, %v358
        %v360 = vsel %vm357, %v359, %v355
        %v361 = vmul.f32 1.0, %v360
        %364 = vrot.lane.b32.xlu0 %v346, 64
        %v365 = vpop.permute.xlu0 %364
        %366 = vrot.lane.b32.xlu0 %v361, 64
        %v367 = vpop.permute.xlu0 %366
        %v370 = vmul.f32 %v322, %v365
        %v371 = vmul.f32 %v323, %v367
        %v372 = vld [vmem:[%s3] sm:$0x1]
        %v374 = vperm.slane %v372, 0
        %v376 = vmul.f32 %v370, %v374
        %v377 = vmul.f32 %v371, %v374
        %vm378 = vcmask 523264
        %v379 = vsel %vm378, %v376, 0.0
        %380 = vadd.xlane.f32.xlu0 %v379
        %v381 = vpop.xlane.xlu0 %380
        %v382 = vsel %vm378, %v377, 0.0
        %383 = vadd.xlane.f32.xlu0 %v382
        %v384 = vpop.xlane.xlu0 %383
        %v385 = vld [vmem:[#allocation2] sm:$0x1]
        %v387 = vperm.slane %v385, 0
        %v389 = vadd.f32 %v381, %v387
        %v390 = vadd.f32 %v384, %v387
        %vm391 = vcmask 7168
        %392 = vst.msk [vmem:[%s266] sm:$0xff] %vm391, %v389
        %393 = vst.msk [vmem:[%s266 + $0x8] sm:$0xff] %vm391, %v390
        %s394 = sand.u32 %s140, 1
        %s395 = sand.u32 %s140, 1
        %s396 = smul.addr %s395, 16
        %s397 = scalar_lea.vmem [#allocation7], %s396
        // Predicated region
        $region49: #{tpu_custom_call.1} parent=39 // pred_check
          %p398 = pneg %p150
        $region50: #{tpu_custom_call.1} parent=39 // pred_check_branch
          %400 = sbr.rel (%p398) target = $region52
        $region51: #{tpu_custom_call.1} parent=39 // pred_region
          %s401 = smul.u32 2, %s22
          %s402 = ssub.s32 3, %s401
          %p403 = scmp.lt.s32.totalorder %s402, 2
          %s404 = scalar_select %p403, %s402, 2
          %s405 = smul.u32 8, %s404
          %p406 = scmp.ne.s32.totalorder 0, %s405
          %s407 = smul.addr %s401, 8
          %s408 = scalar_lea.vmem %s5, %s407
          // Predicated region
          $region53: #{tpu_custom_call.1} parent=51 // pred_check
            %p409 = pneg %p406
          $region54: #{tpu_custom_call.1} parent=51 // pred_check_branch
            %411 = sbr.rel (%p409) target = $region56
          $region55: #{tpu_custom_call.1} parent=51 // pred_region
            // Predicated region
            $region57: #{tpu_custom_call.1} parent=55 // pred_check
              _
            $region58: #{tpu_custom_call.1} parent=55 // pred_check_branch
              %413 = sbr.rel (0) target = $region60
            $region59: #{tpu_custom_call.1} parent=55 // pred_region
              // Predicated region
              $region79: #{tpu_custom_call.1} parent=59 // pred_check
                _
              $region80: #{tpu_custom_call.1} parent=59 // pred_check_branch
                %465 = sbr.rel (0) target = $region82
              $region81: #{tpu_custom_call.1} parent=59 // pred_region
                %s466 = sshrl.u32 %s404, 1
                // While loop
                $region83: #{tpu_custom_call.1} parent=81 // loop_pre_header
                  _
                $region84: #{tpu_custom_call.1} parent=81 // loop_header
                  %s468 = sphi 0, %s470
                  %p469 = scmp.ge.s32.totalorder %s468, %s466
                  %s473 = sphi 0, %s482
                  %s474 = sphi %s397, %s485
                  %s475 = sphi %s408, %s486
                $region85: #{tpu_custom_call.1} parent=81 // loop_header_branch
                  %472 = sbr.rel (%p469) target = $region89
                $region86: #{tpu_custom_call.1} parent=81 // loop_body
                  %v476 = vld [vmem:[%s474] sm:$0xff]
                  %477 = vst [vmem:[%s475] sm:$0xff] %v476
                  %v478 = vld [vmem:[%s474 + $0x8] sm:$0xff]
                  %479 = vst [vmem:[%s475 + $0x8] sm:$0xff] %v478
                  %s480 = sadd.s32 1, %s473
                  %p481 = scmp.ge.s32.totalorder %s480, %s466
                  %s482 = scalar_select %p481, 0, %s480
                  %s483 = smul.u32 %s482, 16
                  %s484 = smul.u32 %s482, 16
                  %s485 = scalar_lea.vmem %s397, %s483 [#allocation7]
                  %s486 = scalar_lea.vmem %s408, %s484
                $region87: #{tpu_custom_call.1} parent=81 // loop_footer
                  %s470 = sadd.s32 %s468, 1
                $region88: #{tpu_custom_call.1} parent=81 // loop_footer_branch
                  %467 = sbr.rel target = $region84
                $region89: #{tpu_custom_call.1} parent=81 // loop_exit
                  _
                %s487 = sshrl.u32 %s404, 1
                %s488 = sand.u32 %s404, 1
                %s489 = smul.u32 %s487, 2
                %s490 = smul.u32 8, %s489
                %s491 = scalar_lea.vmem %s397, %s490 [#allocation7]
                %s492 = smul.u32 8, %s489
                %s493 = scalar_lea.vmem %s408, %s492
                // While loop
                $region90: #{tpu_custom_call.1} parent=81 // loop_pre_header
                  _
                $region91: #{tpu_custom_call.1} parent=81 // loop_header
                  %s495 = sphi 0, %s497
                  %p496 = scmp.ge.s32.totalorder %s495, %s488
                  %s500 = sphi 0, %s507
                  %s501 = sphi %s491, %s510
                  %s502 = sphi %s493, %s511
                $region92: #{tpu_custom_call.1} parent=81 // loop_header_branch
                  %499 = sbr.rel (%p496) target = $region96
                $region93: #{tpu_custom_call.1} parent=81 // loop_body
                  %v503 = vld [vmem:[%s501] sm:$0xff]
                  %504 = vst [vmem:[%s502] sm:$0xff] %v503
                  %s505 = sadd.s32 1, %s500
                  %p506 = scmp.ge.s32.totalorder %s505, %s488
                  %s507 = scalar_select %p506, 0, %s505
                  %s508 = smul.u32 %s507, 8
                  %s509 = smul.u32 %s507, 8
                  %s510 = scalar_lea.vmem %s491, %s508 [#allocation7]
                  %s511 = scalar_lea.vmem %s493, %s509
                $region94: #{tpu_custom_call.1} parent=81 // loop_footer
                  %s497 = sadd.s32 %s495, 1
                $region95: #{tpu_custom_call.1} parent=81 // loop_footer_branch
                  %494 = sbr.rel target = $region91
                $region96: #{tpu_custom_call.1} parent=81 // loop_exit
                  _
              $region82: #{tpu_custom_call.1} parent=59 // pred_fallthru
                _
              // Predicated region
              $region97: #{tpu_custom_call.1} parent=59 // pred_check
                _
              $region98: #{tpu_custom_call.1} parent=59 // pred_check_branch
                %513 = sbr.rel target = $region100
              $region99: #{tpu_custom_call.1} parent=59 // pred_region
                _
              $region100: #{tpu_custom_call.1} parent=59 // pred_fallthru
                _
            $region60: #{tpu_custom_call.1} parent=55 // pred_fallthru
              _
            // Predicated region
            $region61: #{tpu_custom_call.1} parent=55 // pred_check
              _
            $region62: #{tpu_custom_call.1} parent=55 // pred_check_branch
              %415 = sbr.rel target = $region64
            $region63: #{tpu_custom_call.1} parent=55 // pred_region
              %s417 = ssub.s32 256, 1
              %s418 = sshrl.u32 %s404, 1
              // While loop
              $region65: #{tpu_custom_call.1} parent=63 // loop_pre_header
                _
              $region66: #{tpu_custom_call.1} parent=63 // loop_header
                %s420 = sphi 0, %s422
                %p421 = scmp.ge.s32.totalorder %s420, %s418
                %s425 = sphi 0, %s434
                %s426 = sphi %s397, %s437
                %s427 = sphi %s408, %s438
              $region67: #{tpu_custom_call.1} parent=63 // loop_header_branch
                %424 = sbr.rel (%p421) target = $region71
              $region68: #{tpu_custom_call.1} parent=63 // loop_body
                %v428 = vld [vmem:[%s426] sm:%s417]
                %429 = vst [vmem:[%s427] sm:%s417] %v428
                %v430 = vld [vmem:[%s426 + $0x8] sm:%s417]
                %431 = vst [vmem:[%s427 + $0x8] sm:%s417] %v430
                %s432 = sadd.s32 1, %s425
                %p433 = scmp.ge.s32.totalorder %s432, %s418
                %s434 = scalar_select %p433, 0, %s432
                %s435 = smul.u32 %s434, 16
                %s436 = smul.u32 %s434, 16
                %s437 = scalar_lea.vmem %s397, %s435 [#allocation7]
                %s438 = scalar_lea.vmem %s408, %s436
              $region69: #{tpu_custom_call.1} parent=63 // loop_footer
                %s422 = sadd.s32 %s420, 1
              $region70: #{tpu_custom_call.1} parent=63 // loop_footer_branch
                %419 = sbr.rel target = $region66
              $region71: #{tpu_custom_call.1} parent=63 // loop_exit
                _
              %s439 = sshrl.u32 %s404, 1
              %s440 = sand.u32 %s404, 1
              %s441 = smul.u32 %s439, 2
              %s442 = smul.u32 8, %s441
              %s443 = scalar_lea.vmem %s397, %s442 [#allocation7]
              %s444 = smul.u32 8, %s441
              %s445 = scalar_lea.vmem %s408, %s444
              // While loop
              $region72: #{tpu_custom_call.1} parent=63 // loop_pre_header
                _
              $region73: #{tpu_custom_call.1} parent=63 // loop_header
                %s447 = sphi 0, %s449
                %p448 = scmp.ge.s32.totalorder %s447, %s440
                %s452 = sphi 0, %s459
                %s453 = sphi %s443, %s462
                %s454 = sphi %s445, %s463
              $region74: #{tpu_custom_call.1} parent=63 // loop_header_branch
                %451 = sbr.rel (%p448) target = $region78
              $region75: #{tpu_custom_call.1} parent=63 // loop_body
                %v455 = vld [vmem:[%s453] sm:%s417]
                %456 = vst [vmem:[%s454] sm:%s417] %v455
                %s457 = sadd.s32 1, %s452
                %p458 = scmp.ge.s32.totalorder %s457, %s440
                %s459 = scalar_select %p458, 0, %s457
                %s460 = smul.u32 %s459, 8
                %s461 = smul.u32 %s459, 8
                %s462 = scalar_lea.vmem %s443, %s460 [#allocation7]
                %s463 = scalar_lea.vmem %s445, %s461
              $region76: #{tpu_custom_call.1} parent=63 // loop_footer
                %s449 = sadd.s32 %s447, 1
              $region77: #{tpu_custom_call.1} parent=63 // loop_footer_branch
                %446 = sbr.rel target = $region73
              $region78: #{tpu_custom_call.1} parent=63 // loop_exit
                _
            $region64: #{tpu_custom_call.1} parent=55 // pred_fallthru
              _
          $region56: #{tpu_custom_call.1} parent=51 // pred_fallthru
            _
          %514 = vnop
        $region52: #{tpu_custom_call.1} parent=39 // pred_fallthru
          _
      $region40: #{tpu_custom_call.1} parent=5 // pred_fallthru
        _
      %p515 = scmp.le.s32.totalorder 2, %s17
      // Predicated region
      $region101: #{tpu_custom_call.1} parent=5 // pred_check
        %p516 = pneg %p515
      $region102: #{tpu_custom_call.1} parent=5 // pred_check_branch
        %518 = sbr.rel (%p516) target = $region104
      $region103: #{tpu_custom_call.1} parent=5 // pred_region
        %s519 = ssub.s32 %s17, 2
        // Predicated region
        $region105: #{tpu_custom_call.1} parent=103 // pred_check
          %p520 = pneg %p156
        $region106: #{tpu_custom_call.1} parent=103 // pred_check_branch
          %522 = sbr.rel (%p520) target = $region108
        $region107: #{tpu_custom_call.1} parent=103 // pred_region
          %s523 = sand.u32 %s141, 1
          %s524 = sand.u32 %s141, 1
          %s525 = smul.addr %s524, 16
          %s526 = scalar_lea.vmem [#allocation7], %s525
        $region108: #{tpu_custom_call.1} parent=103 // pred_fallthru
          _
      $region104: #{tpu_custom_call.1} parent=5 // pred_fallthru
        _
    $region6: #{tpu_custom_call.1} parent=1 // loop_footer
      %s21 = sadd.s32 1, %s17
    $region7: #{tpu_custom_call.1} parent=1 // loop_footer_branch
      %16 = sbr.rel target = $region3
    $region8: #{tpu_custom_call.1} parent=1 // loop_exit
      _
    %527 = vsyncpa [#allocation4], 1
    %s528 = scalar_lea.sflag [#allocation4], 1
    %529 = vsyncpa %s528, 1
    %530 = vsyncpa [#allocation6], 1

</llo_original>
